<compile_context>
chip_gen: v5e
topology: v5e:2x2
jax: 0.10.0
libtpu: 0.0.40
codegen_flags: <defaults>
</compile_context>

<pallas_src>
import functools

import jax
import jax.numpy as jnp
from jax import lax
from jax.experimental import pallas as pl
from jax.experimental.pallas import tpu as pltpu


def intent_pool_kernel(len_ref, feat_ref, wc_ref, bc_ref, wa_ref, out_ref, *, bb, t):
    # len_ref : SMEM int32[Bp]          (scalar-prefetched sequence lengths)
    # feat_ref: (Bb, T, Up) bf16        wc_ref: (Up, Dp) bf16
    # bc_ref  : (1, Dp) f32             wa_ref: (1, Dp) bf16
    # out_ref : (Bb, Dp) f32            (attention-pooled features, lane-dense)
    blk = pl.program_id(0)
    up = feat_ref.shape[2]

    # connector: Linear(upstream_dim -> input_dim) as one MXU GEMM over Bb*T rows
    x = feat_ref[...].reshape(bb * t, up)                                     # (Bb*T, Up) bf16
    h = jnp.dot(x, wc_ref[...], preferred_element_type=jnp.float32)          # (Bb*T, Dp) f32
    h = h + bc_ref[...]
    dp = h.shape[-1]
    h3 = h.reshape(bb, t, dp)                                                 # (Bb, T, Dp)

    # SAP score: elementwise multiply (VPU) + lane reduce (XLU); no N=1 matmul
    wa = wa_ref[...].astype(jnp.float32).reshape(1, 1, dp)
    s = jnp.sum(h3 * wa, axis=-1)                                             # (Bb, T)

    # additive padding mask built in-kernel from SMEM lengths
    t_iota = lax.broadcasted_iota(jnp.int32, (bb, t), 1)
    r_iota = lax.broadcasted_iota(jnp.int32, (bb, t), 0)
    len_mat = jnp.zeros((bb, t), jnp.int32)
    for i in range(bb):                                                       # bb is small & static
        length_i = len_ref[blk * bb + i]
        len_mat = jnp.where(r_iota == i, length_i, len_mat)
    s = s + jnp.where(t_iota < len_mat, 0.0, -100000.0)                       # matches torch mask

    # softmax over time + attention pooling
    m = jnp.max(s, axis=1, keepdims=True)
    e = jnp.exp(s - m)
    att = e / jnp.sum(e, axis=1, keepdims=True)                               # (Bb, T)
    pooled = jnp.sum(att[:, :, None] * h3, axis=1)                            # (Bb, Dp)

    out_ref[...] = pooled


def intent_forward(feats, lengths, w_conn, b_conn, w_sap, w_cls, b_cls, *, block_b=8):
    """feats: (B, T, U) f32, lengths: (B,) int, weights PyTorch-equivalent shapes."""
    B, T, U = feats.shape
    D = w_conn.shape[1]

    assert block_b % 8 == 0, "block_b must be a multiple of 8 (sublane tiling)"

    # pad lane dims to 128 and batch to a multiple of block_b
    Up = -(-U // 128) * 128
    Dp = -(-D // 128) * 128
    Bp = -(-B // block_b) * block_b

    feats_p = jnp.pad(feats, ((0, Bp - B), (0, 0), (0, Up - U))).astype(jnp.bfloat16)
    wc_p = jnp.pad(w_conn, ((0, Up - U), (0, Dp - D))).astype(jnp.bfloat16)
    bc_p = jnp.pad(b_conn, ((0, 0), (0, Dp - D))).astype(jnp.float32)
    wa_p = jnp.pad(w_sap.reshape(1, D), ((0, 0), (0, Dp - D))).astype(jnp.bfloat16)
    len_p = jnp.pad(jnp.asarray(lengths, jnp.int32), (0, Bp - B), constant_values=T)

    pooled = pl.pallas_call(
        functools.partial(intent_pool_kernel, bb=block_b, t=T),
        out_shape=jax.ShapeDtypeStruct((Bp, Dp), jnp.float32),
        grid_spec=pltpu.PrefetchScalarGridSpec(
            num_scalar_prefetch=1,
            grid=(Bp // block_b,),
            in_specs=[
                pl.BlockSpec((block_b, T, Up), lambda b, lens: (b, 0, 0)),
                pl.BlockSpec((Up, Dp), lambda b, lens: (0, 0)),
                pl.BlockSpec((1, Dp), lambda b, lens: (0, 0)),
                pl.BlockSpec((1, Dp), lambda b, lens: (0, 0)),
            ],
            out_specs=pl.BlockSpec((block_b, Dp), lambda b, lens: (b, 0)),
        ),
        compiler_params=pltpu.CompilerParams(
            dimension_semantics=("parallel",),        # shards across v7x's 2 TCs
            vmem_limit_bytes=32 * 1024 * 1024,        # safe on v7x's 64 MiB VMEM
        ),
    )(len_p, feats_p, wc_p, bc_p, wa_p)

    # classifier head in XLA: one lane-friendly GEMM with M = B (not M = 1 per step)
    pooled = pooled[:B, :D]
    return pooled @ w_cls + b_cls                                             # (B, C)


def cross_entropy(logits, labels):
    # matches nn.CrossEntropyLoss (mean reduction)
    logz = jax.nn.logsumexp(logits, axis=-1)
    picked = jnp.take_along_axis(logits, labels[:, None], axis=-1)[:, 0]
    return jnp.mean(logz - picked)


def reference_forward(feats, lengths, w_conn, b_conn, w_sap, w_cls, b_cls):
    B, T, _ = feats.shape
    valid = (jnp.arange(T)[None, :] < lengths[:, None]).astype(jnp.float32)
    mask_add = ((1.0 - valid) * -100000.0)[:, :, None]                        # (B, T, 1)
    h = jnp.einsum("btu,ud->btd", feats, w_conn) + b_conn                     # (B, T, D)
    s = jnp.einsum("btd,do->bto", h, w_sap) + mask_add                        # (B, T, 1)
    att = jax.nn.softmax(s, axis=1)
    pooled = jnp.sum(att * h, axis=1)                                         # (B, D)
    return pooled @ w_cls + b_cls                                             # (B, C)


if __name__ == "__main__":
    key = jax.random.PRNGKey(0)
    ks = jax.random.split(key, 8)

    # small, forward-consistent shapes (B chosen so the batch-blocked grid has 2 parallel steps)
    B = 16             # batch
    T = 8              # max sequence length (time frames)
    upstream_dim = 32  # upstream feature dim
    input_dim = 32     # modelrc['input_dim']
    num_intents = 8    # sum(values_per_slot), single 'intent' slot

    # variable-length features -> pad_sequence(batch_first=True) equivalent
    lengths = jax.random.randint(ks[0], (B,), 3, T + 1)
    raw = jax.random.normal(ks[1], (B, T, upstream_dim), jnp.float32)
    valid = (jnp.arange(T)[None, :] < lengths[:, None]).astype(jnp.float32)
    feats_pad = raw * valid[:, :, None]

    # deterministic parameter init (synthetic, no checkpoint load)
    w_conn = 0.05 * jax.random.normal(ks[2], (upstream_dim, input_dim), jnp.float32)
    b_conn = 0.01 * jax.random.normal(ks[3], (1, input_dim), jnp.float32)
    w_sap = 0.05 * jax.random.normal(ks[4], (input_dim, 1), jnp.float32)
    w_cls = 0.05 * jax.random.normal(ks[5], (input_dim, num_intents), jnp.float32)
    b_cls = 0.01 * jax.random.normal(ks[6], (1, num_intents), jnp.float32)

    labels = jax.random.randint(ks[7], (B, 1), 0, num_intents)                # one 'intent' slot

    # Pallas kernel forward
    intent_logits = intent_forward(
        feats_pad, lengths, w_conn, b_conn, w_sap, w_cls, b_cls, block_b=8)
    intent_logits = jax.block_until_ready(intent_logits)

    # slot loop from DownstreamExpert.forward (single slot here)
    intent_loss = cross_entropy(intent_logits, labels[:, 0])
    predicted_intent = jnp.argmax(intent_logits, axis=-1)[:, None]            # (B, 1)
    acc = jnp.prod((predicted_intent == labels).astype(jnp.float32), axis=1)
    jax.block_until_ready((intent_loss, predicted_intent, acc))

    # correctness check vs plain-JAX reference (same bf16-rounded inputs the kernel consumes)
    feats_r = feats_pad.astype(jnp.bfloat16).astype(jnp.float32)
    w_conn_r = w_conn.astype(jnp.bfloat16).astype(jnp.float32)
    w_sap_r = w_sap.astype(jnp.bfloat16).astype(jnp.float32)
    ref_logits = reference_forward(feats_r, lengths, w_conn_r, b_conn, w_sap_r, w_cls, b_cls)
    assert jnp.allclose(intent_logits, ref_logits, atol=1e-3, rtol=1e-3), "mismatch vs reference"

    # TODO(synk): dataset/DataLoader construction and records/logging are host-side and not kernelized.
    print("KERNEL_OK")
</pallas_src>

<mosaic_0001>
module attributes {stable_mosaic.version = 11 : i64} {
  func.func @intent_pool_kernel(%arg0: i32, %arg1: memref<16xi32, #tpu.memory_space<smem>>, %arg2: memref<8x8x128xbf16, #tpu.memory_space<vmem>>, %arg3: memref<128x128xbf16, #tpu.memory_space<vmem>>, %arg4: memref<1x128xf32, #tpu.memory_space<vmem>>, %arg5: memref<1x128xbf16, #tpu.memory_space<vmem>>, %arg6: memref<8x128xf32, #tpu.memory_space<vmem>>) attributes {dimension_semantics = [#tpu.dimension_semantics<parallel>], iteration_bounds = array<i64: 2>, scalar_prefetch = 1 : i64, scratch_operands = 0 : i64, tpu.core_type = #tpu.core_type<tc>, window_params = [{transform_indices = @transform_0, window_bounds = array<i64: 8, 8, 128>}, {pipeline_mode = #tpu.pipeline_mode<synchronous>, transform_indices = @transform_1, window_bounds = array<i64: 128, 128>}, {pipeline_mode = #tpu.pipeline_mode<synchronous>, transform_indices = @transform_2, window_bounds = array<i64: 1, 128>}, {pipeline_mode = #tpu.pipeline_mode<synchronous>, transform_indices = @transform_3, window_bounds = array<i64: 1, 128>}, {transform_indices = @transform_4, window_bounds = array<i64: 8, 128>}]} {
    %c0 = arith.constant 0 : index
    %c0_0 = arith.constant 0 : index
    %c0_1 = arith.constant 0 : index
    %0 = vector.load %arg2[%c0, %c0_0, %c0_1] : memref<8x8x128xbf16, #tpu.memory_space<vmem>>, vector<8x8x128xbf16>
    %1 = vector.shape_cast %0 : vector<8x8x128xbf16> to vector<64x128xbf16>
    %c0_2 = arith.constant 0 : index
    %c0_3 = arith.constant 0 : index
    %2 = vector.load %arg3[%c0_2, %c0_3] : memref<128x128xbf16, #tpu.memory_space<vmem>>, vector<128x128xbf16>
    %cst = arith.constant dense<0.000000e+00> : vector<64x128xf32>
    %3 = tpu.matmul %1, %2, %cst {dimension_numbers = #tpu.dot_dimension_numbers<[1], [0], [0], [1], [0, 0, 1, 1], [], []>} : vector<64x128xbf16>, vector<128x128xbf16>, vector<64x128xf32> -> vector<64x128xf32>
    %c0_4 = arith.constant 0 : index
    %c0_5 = arith.constant 0 : index
    %4 = vector.load %arg4[%c0_4, %c0_5] : memref<1x128xf32, #tpu.memory_space<vmem>>, vector<1x128xf32>
    %5 = vector.broadcast %4 : vector<1x128xf32> to vector<64x128xf32>
    %6 = arith.addf %3, %5 : vector<64x128xf32>
    %7 = vector.shape_cast %6 : vector<64x128xf32> to vector<8x8x128xf32>
    %c0_6 = arith.constant 0 : index
    %c0_7 = arith.constant 0 : index
    %8 = vector.load %arg5[%c0_6, %c0_7] : memref<1x128xbf16, #tpu.memory_space<vmem>>, vector<1x128xbf16>
    %9 = arith.extf %8 : vector<1x128xbf16> to vector<1x128xf32>
    %10 = vector.shape_cast %9 : vector<1x128xf32> to vector<1x1x128xf32>
    %11 = vector.broadcast %10 : vector<1x1x128xf32> to vector<8x8x128xf32>
    %12 = arith.mulf %7, %11 : vector<8x8x128xf32>
    %cst_8 = arith.constant dense<0.000000e+00> : vector<8x8xf32>
    %13 = vector.multi_reduction <add>, %12, %cst_8 [2] : vector<8x8x128xf32> to vector<8x8xf32>
    %14 = tpu.iota {dimensions = array<i32: 1>} : vector<8x8xi32>
    %15 = tpu.iota {dimensions = array<i32: 0>} : vector<8x8xi32>
    %c0_i32 = arith.constant 0 : i32
    %16 = vector.broadcast %c0_i32 : i32 to vector<8x8xi32>
    %c8_i32 = arith.constant 8 : i32
    %17 = arith.muli %arg0, %c8_i32 : i32
    %c0_i32_9 = arith.constant 0 : i32
    %18 = arith.addi %17, %c0_i32_9 : i32
    %19 = arith.index_cast %18 : i32 to index
    %20 = memref.load %arg1[%19] : memref<16xi32, #tpu.memory_space<smem>>
    %c0_i32_10 = arith.constant 0 : i32
    %21 = vector.broadcast %c0_i32_10 : i32 to vector<8x8xi32>
    %22 = arith.cmpi eq, %15, %21 : vector<8x8xi32>
    %23 = vector.broadcast %20 : i32 to vector<8x8xi32>
    %24 = arith.select %22, %23, %16 : vector<8x8xi1>, vector<8x8xi32>
    %c8_i32_11 = arith.constant 8 : i32
    %25 = arith.muli %arg0, %c8_i32_11 : i32
    %c1_i32 = arith.constant 1 : i32
    %26 = arith.addi %25, %c1_i32 : i32
    %27 = arith.index_cast %26 : i32 to index
    %28 = memref.load %arg1[%27] : memref<16xi32, #tpu.memory_space<smem>>
    %c1_i32_12 = arith.constant 1 : i32
    %29 = vector.broadcast %c1_i32_12 : i32 to vector<8x8xi32>
    %30 = arith.cmpi eq, %15, %29 : vector<8x8xi32>
    %31 = vector.broadcast %28 : i32 to vector<8x8xi32>
    %32 = arith.select %30, %31, %24 : vector<8x8xi1>, vector<8x8xi32>
    %c8_i32_13 = arith.constant 8 : i32
    %33 = arith.muli %arg0, %c8_i32_13 : i32
    %c2_i32 = arith.constant 2 : i32
    %34 = arith.addi %33, %c2_i32 : i32
    %35 = arith.index_cast %34 : i32 to index
    %36 = memref.load %arg1[%35] : memref<16xi32, #tpu.memory_space<smem>>
    %c2_i32_14 = arith.constant 2 : i32
    %37 = vector.broadcast %c2_i32_14 : i32 to vector<8x8xi32>
    %38 = arith.cmpi eq, %15, %37 : vector<8x8xi32>
    %39 = vector.broadcast %36 : i32 to vector<8x8xi32>
    %40 = arith.select %38, %39, %32 : vector<8x8xi1>, vector<8x8xi32>
    %c8_i32_15 = arith.constant 8 : i32
    %41 = arith.muli %arg0, %c8_i32_15 : i32
    %c3_i32 = arith.constant 3 : i32
    %42 = arith.addi %41, %c3_i32 : i32
    %43 = arith.index_cast %42 : i32 to index
    %44 = memref.load %arg1[%43] : memref<16xi32, #tpu.memory_space<smem>>
    %c3_i32_16 = arith.constant 3 : i32
    %45 = vector.broadcast %c3_i32_16 : i32 to vector<8x8xi32>
    %46 = arith.cmpi eq, %15, %45 : vector<8x8xi32>
    %47 = vector.broadcast %44 : i32 to vector<8x8xi32>
    %48 = arith.select %46, %47, %40 : vector<8x8xi1>, vector<8x8xi32>
    %c8_i32_17 = arith.constant 8 : i32
    %49 = arith.muli %arg0, %c8_i32_17 : i32
    %c4_i32 = arith.constant 4 : i32
    %50 = arith.addi %49, %c4_i32 : i32
    %51 = arith.index_cast %50 : i32 to index
    %52 = memref.load %arg1[%51] : memref<16xi32, #tpu.memory_space<smem>>
    %c4_i32_18 = arith.constant 4 : i32
    %53 = vector.broadcast %c4_i32_18 : i32 to vector<8x8xi32>
    %54 = arith.cmpi eq, %15, %53 : vector<8x8xi32>
    %55 = vector.broadcast %52 : i32 to vector<8x8xi32>
    %56 = arith.select %54, %55, %48 : vector<8x8xi1>, vector<8x8xi32>
    %c8_i32_19 = arith.constant 8 : i32
    %57 = arith.muli %arg0, %c8_i32_19 : i32
    %c5_i32 = arith.constant 5 : i32
    %58 = arith.addi %57, %c5_i32 : i32
    %59 = arith.index_cast %58 : i32 to index
    %60 = memref.load %arg1[%59] : memref<16xi32, #tpu.memory_space<smem>>
    %c5_i32_20 = arith.constant 5 : i32
    %61 = vector.broadcast %c5_i32_20 : i32 to vector<8x8xi32>
    %62 = arith.cmpi eq, %15, %61 : vector<8x8xi32>
    %63 = vector.broadcast %60 : i32 to vector<8x8xi32>
    %64 = arith.select %62, %63, %56 : vector<8x8xi1>, vector<8x8xi32>
    %c8_i32_21 = arith.constant 8 : i32
    %65 = arith.muli %arg0, %c8_i32_21 : i32
    %c6_i32 = arith.constant 6 : i32
    %66 = arith.addi %65, %c6_i32 : i32
    %67 = arith.index_cast %66 : i32 to index
    %68 = memref.load %arg1[%67] : memref<16xi32, #tpu.memory_space<smem>>
    %c6_i32_22 = arith.constant 6 : i32
    %69 = vector.broadcast %c6_i32_22 : i32 to vector<8x8xi32>
    %70 = arith.cmpi eq, %15, %69 : vector<8x8xi32>
    %71 = vector.broadcast %68 : i32 to vector<8x8xi32>
    %72 = arith.select %70, %71, %64 : vector<8x8xi1>, vector<8x8xi32>
    %c8_i32_23 = arith.constant 8 : i32
    %73 = arith.muli %arg0, %c8_i32_23 : i32
    %c7_i32 = arith.constant 7 : i32
    %74 = arith.addi %73, %c7_i32 : i32
    %75 = arith.index_cast %74 : i32 to index
    %76 = memref.load %arg1[%75] : memref<16xi32, #tpu.memory_space<smem>>
    %c7_i32_24 = arith.constant 7 : i32
    %77 = vector.broadcast %c7_i32_24 : i32 to vector<8x8xi32>
    %78 = arith.cmpi eq, %15, %77 : vector<8x8xi32>
    %79 = vector.broadcast %76 : i32 to vector<8x8xi32>
    %80 = arith.select %78, %79, %72 : vector<8x8xi1>, vector<8x8xi32>
    %81 = arith.cmpi slt, %14, %80 : vector<8x8xi32>
    %cst_25 = arith.constant 0.000000e+00 : f32
    %cst_26 = arith.constant -1.000000e+05 : f32
    %82 = vector.broadcast %cst_25 : f32 to vector<8x8xf32>
    %83 = vector.broadcast %cst_26 : f32 to vector<8x8xf32>
    %84 = arith.select %81, %82, %83 : vector<8x8xi1>, vector<8x8xf32>
    %85 = arith.addf %13, %84 : vector<8x8xf32>
    %cst_27 = arith.constant dense<0xFF800000> : vector<8xf32>
    %86 = vector.multi_reduction <maximumf>, %85, %cst_27 [1] : vector<8x8xf32> to vector<8xf32>
    %87 = vector.shape_cast %86 : vector<8xf32> to vector<8x1xf32>
    %88 = vector.broadcast %87 : vector<8x1xf32> to vector<8x8xf32>
    %89 = arith.subf %85, %88 : vector<8x8xf32>
    %90 = math.exp %89 : vector<8x8xf32>
    %cst_28 = arith.constant dense<0.000000e+00> : vector<8xf32>
    %91 = vector.multi_reduction <add>, %90, %cst_28 [1] : vector<8x8xf32> to vector<8xf32>
    %92 = vector.shape_cast %91 : vector<8xf32> to vector<8x1xf32>
    %93 = vector.broadcast %92 : vector<8x1xf32> to vector<8x8xf32>
    %94 = arith.divf %90, %93 : vector<8x8xf32>
    %95 = vector.shape_cast %94 : vector<8x8xf32> to vector<8x8x1xf32>
    %96 = vector.broadcast %95 : vector<8x8x1xf32> to vector<8x8x128xf32>
    %97 = arith.mulf %96, %7 : vector<8x8x128xf32>
    %cst_29 = arith.constant dense<0.000000e+00> : vector<8x128xf32>
    %98 = vector.multi_reduction <add>, %97, %cst_29 [1] : vector<8x8x128xf32> to vector<8x128xf32>
    %c0_30 = arith.constant 0 : index
    %c0_31 = arith.constant 0 : index
    %99 = vector.load %arg6[%c0_30, %c0_31] : memref<8x128xf32, #tpu.memory_space<vmem>>, vector<8x128xf32>
    tpu.vector_store %arg6[%c0_30, %c0_31], %98 {strides = array<i32>} : memref<8x128xf32, #tpu.memory_space<vmem>>, vector<8x128xf32>,
    return
  }
  func.func @transform_0(%arg0: i32, %arg1: memref<16xi32, #tpu.memory_space<smem>>) -> (i32, i32, i32) {
    %c0_i32 = arith.constant 0 : i32
    %c0_i32_0 = arith.constant 0 : i32
    %c0_i32_1 = arith.constant 0 : i32
    return %arg0, %c0_i32, %c0_i32_0 : i32, i32, i32
  }
  func.func @transform_1(%arg0: i32, %arg1: memref<16xi32, #tpu.memory_space<smem>>) -> (i32, i32) {
    %c0_i32 = arith.constant 0 : i32
    %c0_i32_0 = arith.constant 0 : i32
    %c0_i32_1 = arith.constant 0 : i32
    return %c0_i32, %c0_i32_0 : i32, i32
  }
  func.func @transform_2(%arg0: i32, %arg1: memref<16xi32, #tpu.memory_space<smem>>) -> (i32, i32) {
    %c0_i32 = arith.constant 0 : i32
    %c0_i32_0 = arith.constant 0 : i32
    %c0_i32_1 = arith.constant 0 : i32
    return %c0_i32, %c0_i32_0 : i32, i32
  }
  func.func @transform_3(%arg0: i32, %arg1: memref<16xi32, #tpu.memory_space<smem>>) -> (i32, i32) {
    %c0_i32 = arith.constant 0 : i32
    %c0_i32_0 = arith.constant 0 : i32
    %c0_i32_1 = arith.constant 0 : i32
    return %c0_i32, %c0_i32_0 : i32, i32
  }
  func.func @transform_4(%arg0: i32, %arg1: memref<16xi32, #tpu.memory_space<smem>>) -> (i32, i32) {
    %c0_i32 = arith.constant 0 : i32
    %c0_i32_0 = arith.constant 0 : i32
    return %arg0, %c0_i32 : i32, i32
  }
}

</mosaic_0001>

<llo_original>
// kernel: tpu_custom_call.1
$region0: #{tpu_custom_call.1}
  #allocation0 [shape = 'u32[]', space=smem, size = 0x4, offset = 0x4, fixed_abs, tag = 'smem constant byte address 0x4 - core index']
  #allocation1 [shape = 'u32[72,128]{1,0:T(1,128)}', space=vmem, size = 0x9000, scoped, tag = 'internal scratch']
  #allocation2 [shape = 's32[1]{0}', space=sflag, size = 0x4, scoped, tag = 'scoped memory for tpu_custom_call.1']
  #allocation3 [shape = 'u8[512]{0}', space=smem, size = 0x200, scoped, tag = 'prefetched SMEM operand 0']
  %s0 = inlined_call_operand.hbm [shape: s32[16], index: 0, kind: input, shape index: {}]
  %s1 = inlined_call_operand.hbm [shape: bf16[16,8,128], index: 1, kind: input, shape index: {}]
  %s2 = inlined_call_operand.hbm [shape: bf16[128,128], index: 2, kind: input, shape index: {}]
  %s3 = inlined_call_operand.vmem [shape: f32[1,128], index: 3, kind: input, shape index: {}]
  %s4 = inlined_call_operand.vmem [shape: bf16[1,128], index: 4, kind: input, shape index: {}]
  %s5 = inlined_call_operand.hbm [shape: f32[16,128], index: 5, kind: output, shape index: {}]
  %s6 = sld [smem:[#allocation0]]
  $region57: #{tpu_custom_call.1} parent=0
    _
  %s8 = ssub.s32 1, %s6
  %s9 = scalar_select 0, %s8, %s6
  %s11 = sshll.u32 %s0, 4
  %s12 = int_to_ptr.hbm [resolvable:$true] %s11
  %14 = dma.hbm_to_smem %s12, 16, [#allocation3], [#allocation2]
  %16 = dma.done [#allocation2], 16
  %17 = sfence
  $region1: #{tpu_custom_call.1} parent=0
    #allocation4 [shape = 'u8[32768]{0}', space=vmem, size = 0x8000, scoped, tag = 'input window, operand 1']
    #allocation5 [shape = 's32[2]{0}', space=sflag, size = 0x8, scoped, tag = 'scoped memory for tpu_custom_call.1']
    #allocation6 [shape = 's32[2]{0}', space=sflag, size = 0x8, scoped, tag = 'scoped memory for tpu_custom_call.1']
    #allocation7 [shape = 'u8[32768]{0}', space=vmem, size = 0x8000, scoped, tag = 'input window, operand 2, single buffered']
    #allocation8 [shape = 's32[1]{0}', space=sflag, size = 0x4, scoped, tag = 'scoped memory for tpu_custom_call.1']
    #allocation9 [shape = 'u8[8192]{0}', space=vmem, size = 0x2000, scoped, tag = 'output window, operand 0']
    %18 = vsyncpa [#allocation5], 0
    %s19 = scalar_lea.sflag [#allocation5], 1
    %20 = vsyncpa %s19, 0
    %21 = vsyncpa [#allocation8], 0
    %22 = vsyncpa [#allocation6], 0
    %s23 = scalar_lea.sflag [#allocation6], 1
    %24 = vsyncpa %s23, 0
    loop: start=0, step=1, limit=4
    $region2: #{tpu_custom_call.1} parent=1 // loop_pre_header
      _
    $region3: #{tpu_custom_call.1} parent=1 // loop_header
      %s26 = sphi 0, %s30
      %p27 = scmp.ge.s32.totalorder %s26, 4
      %s36 = sphi 0, %s38
      %s39 = sphi 0, %s36
      %s40 = sphi 0, %s39
      %s56 = sphi 0, %s40
      %s60 = sphi 0, %s60
      %s62 = sphi 0, %s60
      %s63 = sphi 0, %s62
      %s77 = sphi 0, %s63
      %s81 = sphi 0, %s81
      %s83 = sphi 0, %s81
      %s84 = sphi 0, %s83
      %s98 = sphi 0, %s84
      %s102 = sphi 0, %s102
      %s104 = sphi 0, %s102
      %s105 = sphi 0, %s104
      %s119 = sphi 0, %s105
      %s125 = sphi 0, %s127
      %s128 = sphi 0, %s125
      %s129 = sphi 0, %s128
      %s145 = sphi 0, %s129
    $region4: #{tpu_custom_call.1} parent=1 // loop_header_branch
      %29 = sbr.rel (%p27) target = $region8
    $region5: #{tpu_custom_call.1} parent=1 // loop_body
      %s31 = ssub.s32 %s26, 1
      %s32 = ssub.s32 %s26, 2
      %s33 = sadd.s32 %s26, 1
      %s34 = ssub.s32 %s26, %s33
      %p35 = scmp.eq.s32.totalorder %s34, 0
      %s37 = sadd.s32 %s36, 1
      %s38 = scalar_select %p35, %s36, %s37
      %p41 = pneg %p35
      %p42 = scmp.eq.s32.totalorder %s26, 1
      %p43 = por %p41, %p42
      %p44 = scmp.ne.s32.totalorder %s36, %s39
      %p45 = scmp.eq.s32.totalorder %s26, 0
      %p46 = por %p44, %p45
      %p47 = scmp.ne.s32.totalorder %s36, %s39
      %p48 = scmp.eq.s32.totalorder %s31, 1
      %p49 = por %p47, %p48
      %p50 = scmp.ne.s32.totalorder %s39, %s40
      %p51 = scmp.eq.s32.totalorder %s31, 0
      %p52 = por %p50, %p51
      %p53 = scmp.ne.s32.totalorder %s39, %s40
      %p54 = scmp.eq.s32.totalorder %s32, 1
      %p55 = por %p53, %p54
      %p57 = scmp.ne.s32.totalorder %s40, %s56
      %p58 = scmp.eq.s32.totalorder %s32, 0
      %p59 = por %p57, %p58
      %s61 = sadd.s32 %s60, 1
      %p64 = scmp.eq.s32.totalorder %s26, 1
      %p65 = scmp.ne.s32.totalorder %s60, %s62
      %p66 = scmp.eq.s32.totalorder %s26, 0
      %p67 = por %p65, %p66
      %p68 = scmp.ne.s32.totalorder %s60, %s62
      %p69 = scmp.eq.s32.totalorder %s31, 1
      %p70 = por %p68, %p69
      %p71 = scmp.ne.s32.totalorder %s62, %s63
      %p72 = scmp.eq.s32.totalorder %s31, 0
      %p73 = por %p71, %p72
      %p74 = scmp.ne.s32.totalorder %s62, %s63
      %p75 = scmp.eq.s32.totalorder %s32, 1
      %p76 = por %p74, %p75
      %p78 = scmp.ne.s32.totalorder %s63, %s77
      %p79 = scmp.eq.s32.totalorder %s32, 0
      %p80 = por %p78, %p79
      %s82 = sadd.s32 %s81, 1
      %p85 = scmp.eq.s32.totalorder %s26, 1
      %p86 = scmp.ne.s32.totalorder %s81, %s83
      %p87 = scmp.eq.s32.totalorder %s26, 0
      %p88 = por %p86, %p87
      %p89 = scmp.ne.s32.totalorder %s81, %s83
      %p90 = scmp.eq.s32.totalorder %s31, 1
      %p91 = por %p89, %p90
      %p92 = scmp.ne.s32.totalorder %s83, %s84
      %p93 = scmp.eq.s32.totalorder %s31, 0
      %p94 = por %p92, %p93
      %p95 = scmp.ne.s32.totalorder %s83, %s84
      %p96 = scmp.eq.s32.totalorder %s32, 1
      %p97 = por %p95, %p96
      %p99 = scmp.ne.s32.totalorder %s84, %s98
      %p100 = scmp.eq.s32.totalorder %s32, 0
      %p101 = por %p99, %p100
      %s103 = sadd.s32 %s102, 1
      %p106 = scmp.eq.s32.totalorder %s26, 1
      %p107 = scmp.ne.s32.totalorder %s102, %s104
      %p108 = scmp.eq.s32.totalorder %s26, 0
      %p109 = por %p107, %p108
      %p110 = scmp.ne.s32.totalorder %s102, %s104
      %p111 = scmp.eq.s32.totalorder %s31, 1
      %p112 = por %p110, %p111
      %p113 = scmp.ne.s32.totalorder %s104, %s105
      %p114 = scmp.eq.s32.totalorder %s31, 0
      %p115 = por %p113, %p114
      %p116 = scmp.ne.s32.totalorder %s104, %s105
      %p117 = scmp.eq.s32.totalorder %s32, 1
      %p118 = por %p116, %p117
      %p120 = scmp.ne.s32.totalorder %s105, %s119
      %p121 = scmp.eq.s32.totalorder %s32, 0
      %p122 = por %p120, %p121
      %s123 = ssub.s32 %s26, %s33
      %p124 = scmp.eq.s32.totalorder %s123, 0
      %s126 = sadd.s32 %s125, 1
      %s127 = scalar_select %p124, %s125, %s126
      %p130 = pneg %p124
      %p131 = scmp.eq.s32.totalorder %s26, 1
      %p132 = por %p130, %p131
      %p133 = scmp.ne.s32.totalorder %s125, %s128
      %p134 = scmp.eq.s32.totalorder %s26, 0
      %p135 = por %p133, %p134
      %p136 = scmp.ne.s32.totalorder %s125, %s128
      %p137 = scmp.eq.s32.totalorder %s31, 1
      %p138 = por %p136, %p137
      %p139 = scmp.ne.s32.totalorder %s128, %s129
      %p140 = scmp.eq.s32.totalorder %s31, 0
      %p141 = por %p139, %p140
      %p142 = scmp.ne.s32.totalorder %s128, %s129
      %p143 = scmp.eq.s32.totalorder %s32, 1
      %p144 = por %p142, %p143
      %p146 = scmp.ne.s32.totalorder %s129, %s145
      %p147 = scmp.eq.s32.totalorder %s32, 0
      %p148 = por %p146, %p147
      %p149 = scmp.le.s32.totalorder 1, %s26
      %p150 = scmp.lt.s32.totalorder %s26, 3
      %p151 = pnand %p149, %p150
      %p152 = pneg %p151
      // Predicated region
      $region9: #{tpu_custom_call.1} parent=5 // pred_check
        _
      $region10: #{tpu_custom_call.1} parent=5 // pred_check_branch
        %154 = sbr.rel (%p151) target = $region12
      $region11: #{tpu_custom_call.1} parent=5 // pred_region
        %s155 = ssub.s32 %s26, 1
        // Predicated region
        $region13: #{tpu_custom_call.1} parent=11 // pred_check
          %p156 = pneg %p73
        $region14: #{tpu_custom_call.1} parent=11 // pred_check_branch
          %158 = sbr.rel (%p156) target = $region16
        $region15: #{tpu_custom_call.1} parent=11 // pred_region
          %160 = vsyncadd [#allocation8], 0
          %s161 = sshll.u32 %s2, 4
          %s162 = int_to_ptr.hbm [resolvable:$true] %s161
          %s163 = sshll.u32 [#allocation7], 4
          %s164 = int_to_ptr.vmem [resolvable:$true] %s163
          %169 = dma.hbm_to_vmem [thread:$0]  %s162, 1024, %s164, [#allocation8], 64, 64, 4
        $region16: #{tpu_custom_call.1} parent=11 // pred_fallthru
          _
        // Predicated region
        $region17: #{tpu_custom_call.1} parent=11 // pred_check
          %p170 = pneg %p94
        $region18: #{tpu_custom_call.1} parent=11 // pred_check_branch
          %172 = sbr.rel (%p170) target = $region20
        $region19: #{tpu_custom_call.1} parent=11 // pred_region
          _
        $region20: #{tpu_custom_call.1} parent=11 // pred_fallthru
          _
        // Predicated region
        $region21: #{tpu_custom_call.1} parent=11 // pred_check
          %p173 = pneg %p115
        $region22: #{tpu_custom_call.1} parent=11 // pred_check_branch
          %175 = sbr.rel (%p173) target = $region24
        $region23: #{tpu_custom_call.1} parent=11 // pred_region
          _
        $region24: #{tpu_custom_call.1} parent=11 // pred_fallthru
          _
      $region12: #{tpu_custom_call.1} parent=5 // pred_fallthru
        _
      %p176 = scmp.lt.s32.totalorder %s26, 2
      // Predicated region
      $region25: #{tpu_custom_call.1} parent=5 // pred_check
        %p177 = pneg %p176
      $region26: #{tpu_custom_call.1} parent=5 // pred_check_branch
        %179 = sbr.rel (%p177) target = $region28
      $region27: #{tpu_custom_call.1} parent=5 // pred_region
        // Predicated region
        $region29: #{tpu_custom_call.1} parent=27 // pred_check
          %p180 = pneg %p46
        $region30: #{tpu_custom_call.1} parent=27 // pred_check_branch
          %182 = sbr.rel (%p180) target = $region32
        $region31: #{tpu_custom_call.1} parent=27 // pred_region
          %s183 = sand.u32 %s36, 1
          %s184 = scalar_lea.sflag [#allocation5], %s183
          %s185 = sand.u32 %s36, 1
          %s186 = smul.addr %s185, 32
          %s187 = scalar_lea.vmem [#allocation4], %s186
          %s188 = smul.u32 8, %s26
          %190 = vsyncadd %s184, 0
          %s191 = smul.addr %s188, 4
          %s192 = scalar_lea.hbm %s1, %s191
          %s193 = sshll.u32 %s192, 4
          %s194 = int_to_ptr.hbm [resolvable:$true] %s193
          %s195 = sshll.u32 %s187, 4
          %s196 = int_to_ptr.vmem [resolvable:$true] %s195
          %201 = dma.hbm_to_vmem [thread:$0]  %s194, 512, %s196, %s184, 64, 64, 4
        $region32: #{tpu_custom_call.1} parent=27 // pred_fallthru
          _
      $region28: #{tpu_custom_call.1} parent=5 // pred_fallthru
        _
      %p202 = scmp.le.s32.totalorder 1, %s26
      %p203 = scmp.lt.s32.totalorder %s26, 3
      %p204 = pnand %p202, %p203
      %p205 = pneg %p204
      // Predicated region
      $region33: #{tpu_custom_call.1} parent=5 // pred_check
        _
      $region34: #{tpu_custom_call.1} parent=5 // pred_check_branch
        %207 = sbr.rel (%p204) target = $region36
      $region35: #{tpu_custom_call.1} parent=5 // pred_region
        %s208 = ssub.s32 %s26, 1
        %s209 = sand.u32 %s39, 1
        %s210 = scalar_lea.sflag [#allocation5], %s209
        %s211 = sand.u32 %s39, 1
        %s212 = smul.addr %s211, 32
        %s213 = scalar_lea.vmem [#allocation4], %s212
        // Predicated region
        $region37: #{tpu_custom_call.1} parent=35 // pred_check
          %p214 = pneg %p52
        $region38: #{tpu_custom_call.1} parent=35 // pred_check_branch
          %216 = sbr.rel (%p214) target = $region40
        $region39: #{tpu_custom_call.1} parent=35 // pred_region
          %218 = dma.done %s210, 512
        $region40: #{tpu_custom_call.1} parent=35 // pred_fallthru
          _
        // Predicated region
        $region41: #{tpu_custom_call.1} parent=35 // pred_check
          %p219 = pneg %p73
        $region42: #{tpu_custom_call.1} parent=35 // pred_check_branch
          %221 = sbr.rel (%p219) target = $region44
        $region43: #{tpu_custom_call.1} parent=35 // pred_region
          %223 = dma.done [#allocation8], 1024
        $region44: #{tpu_custom_call.1} parent=35 // pred_fallthru
          _
        %s224 = sand.u32 %s39, 1
        %s225 = scalar_lea.sflag [#allocation5], %s224
        %s226 = sand.u32 %s39, 1
        %s227 = smul.addr %s226, 32
        %s228 = scalar_lea.vmem [#allocation4], %s227
        %p229 = pneg %p52
        %p230 = pneg %p49
        %p231 = pneg %p73
        %p232 = pneg %p70
        %p233 = pneg %p94
        %p234 = pneg %p91
        %p235 = pneg %p115
        %p236 = pneg %p112
        %p237 = pneg %p141
        %p238 = pneg %p138
        %s239 = sand.u32 %s128, 1
        %s240 = scalar_lea.sflag [#allocation6], %s239
        %s241 = sand.u32 %s128, 1
        %s242 = smul.addr %s241, 8
        %s243 = scalar_lea.vmem [#allocation9], %s242
        %s244 = smul.u32 8, %s31
        %v245 = vld [vmem:[%s213] sm:$0xf]
        %v246 = vld [vmem:[%s213 + $0x4] sm:$0xf]
        %v247 = vld [vmem:[%s213 + $0x8] sm:$0xf]
        %v248 = vld [vmem:[%s213 + $0xc] sm:$0xf]
        %v249 = vld [vmem:[%s213 + $0x10] sm:$0xf]
        %v250 = vld [vmem:[%s213 + $0x14] sm:$0xf]
        %v251 = vld [vmem:[%s213 + $0x18] sm:$0xf]
        %v252 = vld [vmem:[%s213 + $0x1c] sm:$0xf]
        %v253 = vld [vmem:[#allocation7] sm:$0xf]
        %v254 = vld [vmem:[#allocation7 + $0x4] sm:$0xf]
        %v255 = vld [vmem:[#allocation7 + $0x8] sm:$0xf]
        %v256 = vld [vmem:[#allocation7 + $0xc] sm:$0xf]
        %v257 = vld [vmem:[#allocation7 + $0x10] sm:$0xf]
        %v258 = vld [vmem:[#allocation7 + $0x14] sm:$0xf]
        %v259 = vld [vmem:[#allocation7 + $0x18] sm:$0xf]
        %v260 = vld [vmem:[#allocation7 + $0x1c] sm:$0xf]
        %v261 = vld [vmem:[#allocation7 + $0x20] sm:$0xf]
        %v262 = vld [vmem:[#allocation7 + $0x24] sm:$0xf]
        %v263 = vld [vmem:[#allocation7 + $0x28] sm:$0xf]
        %v264 = vld [vmem:[#allocation7 + $0x2c] sm:$0xf]
        %v265 = vld [vmem:[#allocation7 + $0x30] sm:$0xf]
        %v266 = vld [vmem:[#allocation7 + $0x34] sm:$0xf]
        %v267 = vld [vmem:[#allocation7 + $0x38] sm:$0xf]
        %v268 = vld [vmem:[#allocation7 + $0x3c] sm:$0xf]
        %v269 = vld [vmem:[%s3] sm:$0x1]
        %v271 = vperm.slane %v269, 0
        %v281 = vunpack.c.l.b16 %v245
        %v282 = vunpack.c.l.b16 %v246
        %v283 = vunpack.c.l.b16 %v247
        %v284 = vunpack.c.l.b16 %v248
        %v285 = vunpack.c.l.b16 %v249
        %v286 = vunpack.c.l.b16 %v250
        %v287 = vunpack.c.l.b16 %v251
        %v288 = vunpack.c.l.b16 %v252
        %v289 = vpack.c.b16 %v282, %v281
        %v290 = vpack.c.b16 %v284, %v283
        %v291 = vpack.c.b16 %v286, %v285
        %v292 = vpack.c.b16 %v288, %v287
        %v313 = vunpack.c.l.b16 %v253
        %v314 = vunpack.c.l.b16 %v254
        %v315 = vunpack.c.l.b16 %v255
        %v316 = vunpack.c.l.b16 %v256
        %v317 = vunpack.c.l.b16 %v257
        %v318 = vunpack.c.l.b16 %v258
        %v319 = vunpack.c.l.b16 %v259
        %v320 = vunpack.c.l.b16 %v260
        %v321 = vunpack.c.l.b16 %v261
        %v322 = vunpack.c.l.b16 %v262
        %v323 = vunpack.c.l.b16 %v263
        %v324 = vunpack.c.l.b16 %v264
        %v325 = vunpack.c.l.b16 %v265
        %v326 = vunpack.c.l.b16 %v266
        %v327 = vunpack.c.l.b16 %v267
        %v328 = vunpack.c.l.b16 %v268
        %v329 = vpack.c.b16 %v314, %v313
        %v330 = vpack.c.b16 %v316, %v315
        %v331 = vpack.c.b16 %v318, %v317
        %v332 = vpack.c.b16 %v320, %v319
        %v333 = vpack.c.b16 %v322, %v321
        %v334 = vpack.c.b16 %v324, %v323
        %v335 = vpack.c.b16 %v326, %v325
        %v336 = vpack.c.b16 %v328, %v327
        %345 = vmatpush.bf16.msra.mxu0 %v336
        %346 = vmatpush.bf16.msra.mxu0 %v335
        %347 = vmatpush.bf16.msra.mxu0 %v334
        %348 = vmatpush.bf16.msra.mxu0 %v333
        %349 = vmatpush.bf16.msra.mxu0 %v332
        %350 = vmatpush.bf16.msra.mxu0 %v331
        %351 = vmatpush.bf16.msra.mxu0 %v330
        %352 = vmatpush.bf16.msra.mxu0 %v329
        %353 = vmatmul.bf16.gmra.mxu0 %v289
        %v354 = vpop.f32.mrf.mxu0
        %v355 = vadd.f32 %v271, %v354
        %v356 = vpop.f32.mrf.mxu0
        %v357 = vadd.f32 %v271, %v356
        %358 = vmatmul.bf16.gmra.mxu0 %v290
        %v359 = vpop.f32.mrf.mxu0
        %v360 = vadd.f32 %v271, %v359
        %v361 = vpop.f32.mrf.mxu0
        %v362 = vadd.f32 %v271, %v361
        %363 = vmatmul.bf16.gmra.mxu0 %v291
        %v364 = vpop.f32.mrf.mxu0
        %v365 = vadd.f32 %v271, %v364
        %v366 = vpop.f32.mrf.mxu0
        %v367 = vadd.f32 %v271, %v366
        %368 = vmatmul.bf16.gmra.mxu0 %v292
        %v369 = vpop.f32.mrf.mxu0
        %v370 = vadd.f32 %v271, %v369
        %v371 = vpop.f32.mrf.mxu0
        %v372 = vadd.f32 %v271, %v371
        %373 = vdwg.mxu0
        %v374 = vld [vmem:[%s4] sm:$0x1]
        %v375 = vunpack.c.l.bf16 %v374
        %v376 = vperm.slane %v375, 0
        %v377 = vmul.f32 %v355, %v376
        %v378 = vmul.f32 %v357, %v376
        %v379 = vmul.f32 %v360, %v376
        %v380 = vmul.f32 %v362, %v376
        %v381 = vmul.f32 %v365, %v376
        %v382 = vmul.f32 %v367, %v376
        %v383 = vmul.f32 %v370, %v376
        %v384 = vmul.f32 %v372, %v376
        %385 = vadd.xlane.f32.xlu0 %v377
        %v386 = vpop.xlane.xlu0 %385
        %387 = vadd.xlane.f32.xlu0 %v378
        %v388 = vpop.xlane.xlu0 %387
        %389 = vadd.xlane.f32.xlu0 %v379
        %v390 = vpop.xlane.xlu0 %389
        %391 = vadd.xlane.f32.xlu0 %v380
        %v392 = vpop.xlane.xlu0 %391
        %393 = vadd.xlane.f32.xlu0 %v381
        %v394 = vpop.xlane.xlu0 %393
        %395 = vadd.xlane.f32.xlu0 %v382
        %v396 = vpop.xlane.xlu0 %395
        %397 = vadd.xlane.f32.xlu0 %v383
        %v398 = vpop.xlane.xlu0 %397
        %399 = vadd.xlane.f32.xlu0 %v384
        %v400 = vpop.xlane.xlu0 %399
        %v401 = vlaneseq
        %v402 = vand.u32 %v401, 127
        %v403 = vlaneseq
        %v404 = vshrl.u32 %v403, 7
        %s405 = smul.u32 %s31, 8
        %s406 = sld [smem:[#allocation3 + %s405]]
        %vm407 = vcmp.eq.s32.totalorder %v404, 0
        %v408 = vstv %s406
        %v409 = vsel %vm407, %v408, 0
        %s410 = sadd.s32 %s405, 1
        %s411 = sld [smem:[#allocation3 + %s410]]
        %vm412 = vcmp.eq.s32.totalorder %v404, 1
        %v413 = vstv %s411
        %v414 = vsel %vm412, %v413, %v409
        %s415 = sadd.s32 %s405, 2
        %s416 = sld [smem:[#allocation3 + %s415]]
        %vm417 = vcmp.eq.s32.totalorder %v404, 2
        %v418 = vstv %s416
        %v419 = vsel %vm417, %v418, %v414
        %s420 = sadd.s32 %s405, 3
        %s421 = sld [smem:[#allocation3 + %s420]]
        %vm422 = vcmp.eq.s32.totalorder %v404, 3
        %v423 = vstv %s421
        %v424 = vsel %vm422, %v423, %v419
        %s425 = sadd.s32 %s405, 4
        %s426 = sld [smem:[#allocation3 + %s425]]
        %vm427 = vcmp.eq.s32.totalorder %v404, 4
        %v428 = vstv %s426
        %v429 = vsel %vm427, %v428, %v424
        %s430 = sadd.s32 %s405, 5
        %s431 = sld [smem:[#allocation3 + %s430]]
        %vm432 = vcmp.eq.s32.totalorder %v404, 5
        %v433 = vstv %s431
        %v434 = vsel %vm432, %v433, %v429
        %s435 = sadd.s32 %s405, 6
        %s436 = sld [smem:[#allocation3 + %s435]]
        %vm437 = vcmp.eq.s32.totalorder %v404, 6
        %v438 = vstv %s436
        %v439 = vsel %vm437, %v438, %v434
        %s440 = sadd.s32 %s405, 7
        %s441 = sld [smem:[#allocation3 + %s440]]
        %vm442 = vcmp.eq.s32.totalorder %v404, 7
        %v443 = vstv %s441
        %v444 = vsel %vm442, %v443, %v439
        %vm445 = vcmp.lt.s32.totalorder %v402, %v444
        %v446 = vsel %vm445, 0.0, -100000.0
        %v448 = vperm.slane %v446, 0
        %v449 = vlaneseq
        %v450 = vshrl.u32 %v449, 7
        %452 = vset.pattern.permute.xlu0 %v450
        %453 = vperm.xlu0 %452, %v448
        %v454 = vpop.permute.xlu0 %453
        %v455 = vperm.slane %v446, 1
        %v456 = vlaneseq
        %v457 = vshrl.u32 %v456, 7
        %459 = vset.pattern.permute.xlu0 %v457
        %460 = vperm.xlu0 %459, %v455
        %v461 = vpop.permute.xlu0 %460
        %v462 = vperm.slane %v446, 2
        %v463 = vlaneseq
        %v464 = vshrl.u32 %v463, 7
        %466 = vset.pattern.permute.xlu0 %v464
        %467 = vperm.xlu0 %466, %v462
        %v468 = vpop.permute.xlu0 %467
        %v469 = vperm.slane %v446, 3
        %v470 = vlaneseq
        %v471 = vshrl.u32 %v470, 7
        %473 = vset.pattern.permute.xlu0 %v471
        %474 = vperm.xlu0 %473, %v469
        %v475 = vpop.permute.xlu0 %474
        %v476 = vperm.slane %v446, 4
        %v477 = vlaneseq
        %v478 = vshrl.u32 %v477, 7
        %480 = vset.pattern.permute.xlu0 %v478
        %481 = vperm.xlu0 %480, %v476
        %v482 = vpop.permute.xlu0 %481
        %v483 = vperm.slane %v446, 5
        %v484 = vlaneseq
        %v485 = vshrl.u32 %v484, 7
        %487 = vset.pattern.permute.xlu0 %v485
        %488 = vperm.xlu0 %487, %v483
        %v489 = vpop.permute.xlu0 %488
        %v490 = vperm.slane %v446, 6
        %v491 = vlaneseq
        %v492 = vshrl.u32 %v491, 7
        %494 = vset.pattern.permute.xlu0 %v492
        %495 = vperm.xlu0 %494, %v490
        %v496 = vpop.permute.xlu0 %495
        %v497 = vperm.slane %v446, 7
        %v498 = vlaneseq
        %v499 = vshrl.u32 %v498, 7
        %501 = vset.pattern.permute.xlu0 %v499
        %502 = vperm.xlu0 %501, %v497
        %v503 = vpop.permute.xlu0 %502
        %v512 = vadd.f32 %v386, %v454
        %v513 = vadd.f32 %v388, %v461
        %v514 = vadd.f32 %v390, %v468
        %v515 = vadd.f32 %v392, %v475
        %v516 = vadd.f32 %v394, %v482
        %v517 = vadd.f32 %v396, %v489
        %v518 = vadd.f32 %v398, %v496
        %v519 = vadd.f32 %v400, %v503
        %528 = vset.pattern.permute.xlu0 0
        %529 = vperm.xlu0 %528, %v512
        %v530 = vpop.permute.xlu0 %529
        %531 = vset.pattern.permute.xlu0 0
        %532 = vperm.xlu0 %531, %v513
        %v533 = vpop.permute.xlu0 %532
        %534 = vset.pattern.permute.xlu0 0
        %535 = vperm.xlu0 %534, %v514
        %v536 = vpop.permute.xlu0 %535
        %537 = vset.pattern.permute.xlu0 0
        %538 = vperm.xlu0 %537, %v515
        %v539 = vpop.permute.xlu0 %538
        %540 = vset.pattern.permute.xlu0 0
        %541 = vperm.xlu0 %540, %v516
        %v542 = vpop.permute.xlu0 %541
        %543 = vset.pattern.permute.xlu0 0
        %544 = vperm.xlu0 %543, %v517
        %v545 = vpop.permute.xlu0 %544
        %546 = vset.pattern.permute.xlu0 0
        %547 = vperm.xlu0 %546, %v518
        %v548 = vpop.permute.xlu0 %547
        %549 = vset.pattern.permute.xlu0 0
        %550 = vperm.xlu0 %549, %v519
        %v551 = vpop.permute.xlu0 %550
        %v552 = vperm.slane %v530, %v402
        %v553 = vperm.slane %v533, %v402
        %v554 = vperm.slane %v536, %v402
        %v555 = vperm.slane %v539, %v402
        %v556 = vperm.slane %v542, %v402
        %v557 = vperm.slane %v545, %v402
        %v558 = vperm.slane %v548, %v402
        %v559 = vperm.slane %v551, %v402
        %vm560 = vcmask 1041409
        %v561 = vsel %vm560, %v553, %v552
        %vm562 = vcmask 1042434
        %v563 = vsel %vm562, %v554, %v561
        %vm564 = vcmask 1043459
        %v565 = vsel %vm564, %v555, %v563
        %vm566 = vcmask 1044484
        %v567 = vsel %vm566, %v556, %v565
        %vm568 = vcmask 1045509
        %v569 = vsel %vm568, %v557, %v567
        %vm570 = vcmask 1046534
        %v571 = vsel %vm570, %v558, %v569
        %vm572 = vcmask 1047559
        %v573 = vsel %vm572, %v559, %v571
        %vm575 = vcmask 64512
        %v576 = vsel %vm575, %v573, -inf
        %577 = vmax.xlane.f32.xlu0 %v576
        %v578 = vpop.xlane.xlu0 %577
        %v580 = vperm.slane %v578, 0
        %v581 = vperm.slane %v578, 1
        %v582 = vperm.slane %v578, 2
        %v583 = vperm.slane %v578, 3
        %v584 = vperm.slane %v578, 4
        %v585 = vperm.slane %v578, 5
        %v586 = vperm.slane %v578, 6
        %v587 = vperm.slane %v578, 7
        %v596 = vsub.f32 %v512, %v580
        %v597 = vsub.f32 %v513, %v581
        %v598 = vsub.f32 %v514, %v582
        %v599 = vsub.f32 %v515, %v583
        %v600 = vsub.f32 %v516, %v584
        %v601 = vsub.f32 %v517, %v585
        %v602 = vsub.f32 %v518, %v586
        %v603 = vsub.f32 %v519, %v587
        %v604 = vmul.f32 %v596, 1.442695
        %v605 = vpow.pop %v604
        %v606 = vmul.f32 %v597, 1.442695
        %v607 = vpow.pop %v606
        %v608 = vmul.f32 %v598, 1.442695
        %v609 = vpow.pop %v608
        %v610 = vmul.f32 %v599, 1.442695
        %v611 = vpow.pop %v610
        %v612 = vmul.f32 %v600, 1.442695
        %v613 = vpow.pop %v612
        %v614 = vmul.f32 %v601, 1.442695
        %v615 = vpow.pop %v614
        %v616 = vmul.f32 %v602, 1.442695
        %v617 = vpow.pop %v616
        %v618 = vmul.f32 %v603, 1.442695
        %v619 = vpow.pop %v618
        %628 = vset.pattern.permute.xlu0 0
        %629 = vperm.xlu0 %628, %v605
        %v630 = vpop.permute.xlu0 %629
        %631 = vset.pattern.permute.xlu0 0
        %632 = vperm.xlu0 %631, %v607
        %v633 = vpop.permute.xlu0 %632
        %634 = vset.pattern.permute.xlu0 0
        %635 = vperm.xlu0 %634, %v609
        %v636 = vpop.permute.xlu0 %635
        %637 = vset.pattern.permute.xlu0 0
        %638 = vperm.xlu0 %637, %v611
        %v639 = vpop.permute.xlu0 %638
        %640 = vset.pattern.permute.xlu0 0
        %641 = vperm.xlu0 %640, %v613
        %v642 = vpop.permute.xlu0 %641
        %643 = vset.pattern.permute.xlu0 0
        %644 = vperm.xlu0 %643, %v615
        %v645 = vpop.permute.xlu0 %644
        %646 = vset.pattern.permute.xlu0 0
        %647 = vperm.xlu0 %646, %v617
        %v648 = vpop.permute.xlu0 %647
        %649 = vset.pattern.permute.xlu0 0
        %650 = vperm.xlu0 %649, %v619
        %v651 = vpop.permute.xlu0 %650
        %v652 = vperm.slane %v630, %v402
        %v653 = vperm.slane %v633, %v402
        %v654 = vperm.slane %v636, %v402
        %v655 = vperm.slane %v639, %v402
        %v656 = vperm.slane %v642, %v402
        %v657 = vperm.slane %v645, %v402
        %v658 = vperm.slane %v648, %v402
        %v659 = vperm.slane %v651, %v402
        %v660 = vsel %vm560, %v653, %v652
        %v661 = vsel %vm562, %v654, %v660
        %v662 = vsel %vm564, %v655, %v661
        %v663 = vsel %vm566, %v656, %v662
        %v664 = vsel %vm568, %v657, %v663
        %v665 = vsel %vm570, %v658, %v664
        %v666 = vsel %vm572, %v659, %v665
        %v668 = vsel %vm575, %v666, 0.0
        %669 = vadd.xlane.f32.xlu0 %v668
        %v670 = vpop.xlane.xlu0 %669
        %v672 = vperm.slane %v670, 0
        %v673 = vperm.slane %v670, 1
        %v674 = vperm.slane %v670, 2
        %v675 = vperm.slane %v670, 3
        %v676 = vperm.slane %v670, 4
        %v677 = vperm.slane %v670, 5
        %v678 = vperm.slane %v670, 6
        %v679 = vperm.slane %v670, 7
        %v688 = vrcp.pop %v672
        %v689 = vmul.f32 %v672, %v688
        %v690 = vsub.f32 1.0, %v689
        %v691 = vmul.f32 %v688, %v690
        %v692 = vadd.f32 %v688, %v691
        %vm693 = vweird.f32 %v672
        %vm694 = vweird.f32 %v688
        %vm695 = vmor %vm693, %vm694
        %v696 = vsel %vm695, %v688, %v692
        %v697 = vand.u32 2147483647, %v672
        %vm698 = vcmp.eq.f32.partialorder %v697, 8.507059e+37
        %v699 = vand.u32 %v672, 2147483648
        %v700 = vor.u32 1.1754944e-38, %v699
        %v701 = vsel %vm698, %v700, %v696
        %v702 = vmul.f32 %v605, %v701
        %v703 = vrcp.pop %v673
        %v704 = vmul.f32 %v673, %v703
        %v705 = vsub.f32 1.0, %v704
        %v706 = vmul.f32 %v703, %v705
        %v707 = vadd.f32 %v703, %v706
        %vm708 = vweird.f32 %v673
        %vm709 = vweird.f32 %v703
        %vm710 = vmor %vm708, %vm709
        %v711 = vsel %vm710, %v703, %v707
        %v712 = vand.u32 2147483647, %v673
        %vm713 = vcmp.eq.f32.partialorder %v712, 8.507059e+37
        %v714 = vand.u32 %v673, 2147483648
        %v715 = vor.u32 1.1754944e-38, %v714
        %v716 = vsel %vm713, %v715, %v711
        %v717 = vmul.f32 %v607, %v716
        %v718 = vrcp.pop %v674
        %v719 = vmul.f32 %v674, %v718
        %v720 = vsub.f32 1.0, %v719
        %v721 = vmul.f32 %v718, %v720
        %v722 = vadd.f32 %v718, %v721
        %vm723 = vweird.f32 %v674
        %vm724 = vweird.f32 %v718
        %vm725 = vmor %vm723, %vm724
        %v726 = vsel %vm725, %v718, %v722
        %v727 = vand.u32 2147483647, %v674
        %vm728 = vcmp.eq.f32.partialorder %v727, 8.507059e+37
        %v729 = vand.u32 %v674, 2147483648
        %v730 = vor.u32 1.1754944e-38, %v729
        %v731 = vsel %vm728, %v730, %v726
        %v732 = vmul.f32 %v609, %v731
        %v733 = vrcp.pop %v675
        %v734 = vmul.f32 %v675, %v733
        %v735 = vsub.f32 1.0, %v734
        %v736 = vmul.f32 %v733, %v735
        %v737 = vadd.f32 %v733, %v736
        %vm738 = vweird.f32 %v675
        %vm739 = vweird.f32 %v733
        %vm740 = vmor %vm738, %vm739
        %v741 = vsel %vm740, %v733, %v737
        %v742 = vand.u32 2147483647, %v675
        %vm743 = vcmp.eq.f32.partialorder %v742, 8.507059e+37
        %v744 = vand.u32 %v675, 2147483648
        %v745 = vor.u32 1.1754944e-38, %v744
        %v746 = vsel %vm743, %v745, %v741
        %v747 = vmul.f32 %v611, %v746
        %v748 = vrcp.pop %v676
        %v749 = vmul.f32 %v676, %v748
        %v750 = vsub.f32 1.0, %v749
        %v751 = vmul.f32 %v748, %v750
        %v752 = vadd.f32 %v748, %v751
        %vm753 = vweird.f32 %v676
        %vm754 = vweird.f32 %v748
        %vm755 = vmor %vm753, %vm754
        %v756 = vsel %vm755, %v748, %v752
        %v757 = vand.u32 2147483647, %v676
        %vm758 = vcmp.eq.f32.partialorder %v757, 8.507059e+37
        %v759 = vand.u32 %v676, 2147483648
        %v760 = vor.u32 1.1754944e-38, %v759
        %v761 = vsel %vm758, %v760, %v756
        %v762 = vmul.f32 %v613, %v761
        %v763 = vrcp.pop %v677
        %v764 = vmul.f32 %v677, %v763
        %v765 = vsub.f32 1.0, %v764
        %v766 = vmul.f32 %v763, %v765
        %v767 = vadd.f32 %v763, %v766
        %vm768 = vweird.f32 %v677
        %vm769 = vweird.f32 %v763
        %vm770 = vmor %vm768, %vm769
        %v771 = vsel %vm770, %v763, %v767
        %v772 = vand.u32 2147483647, %v677
        %vm773 = vcmp.eq.f32.partialorder %v772, 8.507059e+37
        %v774 = vand.u32 %v677, 2147483648
        %v775 = vor.u32 1.1754944e-38, %v774
        %v776 = vsel %vm773, %v775, %v771
        %v777 = vmul.f32 %v615, %v776
        %v778 = vrcp.pop %v678
        %v779 = vmul.f32 %v678, %v778
        %v780 = vsub.f32 1.0, %v779
        %v781 = vmul.f32 %v778, %v780
        %v782 = vadd.f32 %v778, %v781
        %vm783 = vweird.f32 %v678
        %vm784 = vweird.f32 %v778
        %vm785 = vmor %vm783, %vm784
        %v786 = vsel %vm785, %v778, %v782
        %v787 = vand.u32 2147483647, %v678
        %vm788 = vcmp.eq.f32.partialorder %v787, 8.507059e+37
        %v789 = vand.u32 %v678, 2147483648
        %v790 = vor.u32 1.1754944e-38, %v789
        %v791 = vsel %vm788, %v790, %v786
        %v792 = vmul.f32 %v617, %v791
        %v793 = vrcp.pop %v679
        %v794 = vmul.f32 %v679, %v793
        %v795 = vsub.f32 1.0, %v794
        %v796 = vmul.f32 %v793, %v795
        %v797 = vadd.f32 %v793, %v796
        %vm798 = vweird.f32 %v679
        %vm799 = vweird.f32 %v793
        %vm800 = vmor %vm798, %vm799
        %v801 = vsel %vm800, %v793, %v797
        %v802 = vand.u32 2147483647, %v679
        %vm803 = vcmp.eq.f32.partialorder %v802, 8.507059e+37
        %v804 = vand.u32 %v679, 2147483648
        %v805 = vor.u32 1.1754944e-38, %v804
        %v806 = vsel %vm803, %v805, %v801
        %v807 = vmul.f32 %v619, %v806
        %809 = vset.pattern.permute.xlu0 0
        %810 = vperm.xlu0 %809, %v702
        %v811 = vpop.permute.xlu0 %810
        %814 = vset.pattern.permute.xlu0 0
        %815 = vperm.xlu0 %814, %v717
        %v816 = vpop.permute.xlu0 %815
        %819 = vset.pattern.permute.xlu0 0
        %820 = vperm.xlu0 %819, %v732
        %v821 = vpop.permute.xlu0 %820
        %824 = vset.pattern.permute.xlu0 0
        %825 = vperm.xlu0 %824, %v747
        %v826 = vpop.permute.xlu0 %825
        %829 = vset.pattern.permute.xlu0 0
        %830 = vperm.xlu0 %829, %v762
        %v831 = vpop.permute.xlu0 %830
        %834 = vset.pattern.permute.xlu0 0
        %835 = vperm.xlu0 %834, %v777
        %v836 = vpop.permute.xlu0 %835
        %839 = vset.pattern.permute.xlu0 0
        %840 = vperm.xlu0 %839, %v792
        %v841 = vpop.permute.xlu0 %840
        %844 = vset.pattern.permute.xlu0 0
        %845 = vperm.xlu0 %844, %v807
        %v846 = vpop.permute.xlu0 %845
        %v848 = vmul.f32 %v811, %v355
        %v849 = vmul.f32 %v816, %v357
        %v850 = vmul.f32 %v821, %v360
        %v851 = vmul.f32 %v826, %v362
        %v852 = vmul.f32 %v831, %v365
        %v853 = vmul.f32 %v836, %v367
        %v854 = vmul.f32 %v841, %v370
        %v855 = vmul.f32 %v846, %v372
        %v856 = vrot.slane %v848, 4
        %v857 = vadd.f32 %v848, %v856
        %v858 = vrot.slane %v857, 2
        %v859 = vadd.f32 %v857, %v858
        %v860 = vrot.slane %v859, 1
        %v861 = vadd.f32 %v859, %v860
        %v862 = vrot.slane %v849, 4
        %v863 = vadd.f32 %v849, %v862
        %v864 = vrot.slane %v863, 2
        %v865 = vadd.f32 %v863, %v864
        %v866 = vrot.slane %v865, 1
        %v867 = vadd.f32 %v865, %v866
        %v868 = vrot.slane %v850, 4
        %v869 = vadd.f32 %v850, %v868
        %v870 = vrot.slane %v869, 2
        %v871 = vadd.f32 %v869, %v870
        %v872 = vrot.slane %v871, 1
        %v873 = vadd.f32 %v871, %v872
        %v874 = vrot.slane %v851, 4
        %v875 = vadd.f32 %v851, %v874
        %v876 = vrot.slane %v875, 2
        %v877 = vadd.f32 %v875, %v876
        %v878 = vrot.slane %v877, 1
        %v879 = vadd.f32 %v877, %v878
        %v880 = vrot.slane %v852, 4
        %v881 = vadd.f32 %v852, %v880
        %v882 = vrot.slane %v881, 2
        %v883 = vadd.f32 %v881, %v882
        %v884 = vrot.slane %v883, 1
        %v885 = vadd.f32 %v883, %v884
        %v886 = vrot.slane %v853, 4
        %v887 = vadd.f32 %v853, %v886
        %v888 = vrot.slane %v887, 2
        %v889 = vadd.f32 %v887, %v888
        %v890 = vrot.slane %v889, 1
        %v891 = vadd.f32 %v889, %v890
        %v892 = vrot.slane %v854, 4
        %v893 = vadd.f32 %v854, %v892
        %v894 = vrot.slane %v893, 2
        %v895 = vadd.f32 %v893, %v894
        %v896 = vrot.slane %v895, 1
        %v897 = vadd.f32 %v895, %v896
        %v898 = vrot.slane %v855, 4
        %v899 = vadd.f32 %v855, %v898
        %v900 = vrot.slane %v899, 2
        %v901 = vadd.f32 %v899, %v900
        %v902 = vrot.slane %v901, 1
        %v903 = vadd.f32 %v901, %v902
        %v912 = vsel %vm560, %v867, %v861
        %v913 = vsel %vm562, %v873, %v912
        %v914 = vsel %vm564, %v879, %v913
        %v915 = vsel %vm566, %v885, %v914
        %v916 = vsel %vm568, %v891, %v915
        %v917 = vsel %vm570, %v897, %v916
        %v918 = vsel %vm572, %v903, %v917
        %920 = vst [vmem:[%s243] sm:$0xff] %v918
        %s921 = sand.u32 %s128, 1
        %s922 = scalar_lea.sflag [#allocation6], %s921
        %s923 = sand.u32 %s128, 1
        %s924 = smul.addr %s923, 8
        %s925 = scalar_lea.vmem [#allocation9], %s924
        // Predicated region
        $region45: #{tpu_custom_call.1} parent=35 // pred_check
          %p926 = pneg %p138
        $region46: #{tpu_custom_call.1} parent=35 // pred_check_branch
          %928 = sbr.rel (%p926) target = $region48
        $region47: #{tpu_custom_call.1} parent=35 // pred_region
          %930 = vsyncadd %s922, 0
          %s931 = smul.addr %s31, 8
          %s932 = scalar_lea.hbm %s5, %s931
          %s934 = sshll.u32 %s925, 4
          %s935 = int_to_ptr.vmem [resolvable:$true] %s934
          %s936 = sshll.u32 %s932, 4
          %s937 = int_to_ptr.hbm [resolvable:$true] %s936
          %939 = dma.vmem_to_hbm [thread:$0]  %s935, 128, %s937, %s922
        $region48: #{tpu_custom_call.1} parent=35 // pred_fallthru
          _
      $region36: #{tpu_custom_call.1} parent=5 // pred_fallthru
        _
      %p940 = scmp.le.s32.totalorder 2, %s26
      // Predicated region
      $region49: #{tpu_custom_call.1} parent=5 // pred_check
        %p941 = pneg %p940
      $region50: #{tpu_custom_call.1} parent=5 // pred_check_branch
        %943 = sbr.rel (%p941) target = $region52
      $region51: #{tpu_custom_call.1} parent=5 // pred_region
        %s944 = ssub.s32 %s26, 2
        // Predicated region
        $region53: #{tpu_custom_call.1} parent=51 // pred_check
          %p945 = pneg %p144
        $region54: #{tpu_custom_call.1} parent=51 // pred_check_branch
          %947 = sbr.rel (%p945) target = $region56
        $region55: #{tpu_custom_call.1} parent=51 // pred_region
          %s948 = sand.u32 %s129, 1
          %s949 = scalar_lea.sflag [#allocation6], %s948
          %s950 = sand.u32 %s129, 1
          %s951 = smul.addr %s950, 8
          %s952 = scalar_lea.vmem [#allocation9], %s951
          %954 = dma.done %s949, 128
        $region56: #{tpu_custom_call.1} parent=51 // pred_fallthru
          _
      $region52: #{tpu_custom_call.1} parent=5 // pred_fallthru
        _
    $region6: #{tpu_custom_call.1} parent=1 // loop_footer
      %s30 = sadd.s32 1, %s26
    $region7: #{tpu_custom_call.1} parent=1 // loop_footer_branch
      %25 = sbr.rel target = $region3
    $region8: #{tpu_custom_call.1} parent=1 // loop_exit
      _
    %955 = vsyncpa [#allocation5], 1
    %s956 = scalar_lea.sflag [#allocation5], 1
    %957 = vsyncpa %s956, 1
    %958 = vsyncpa [#allocation8], 1
    %959 = vsyncpa [#allocation6], 1
    %s960 = scalar_lea.sflag [#allocation6], 1
    %961 = vsyncpa %s960, 1

</llo_original>
